<compile_context>
chip_gen: v5e
topology: v5e:2x2
jax: 0.10.0
libtpu: 0.0.40
codegen_flags: <defaults>
</compile_context>

<pallas_src>
import functools

import jax
import jax.numpy as jnp
from jax import lax
from jax.experimental import pallas as pl
from jax.experimental.pallas import tpu as pltpu


# --------------------------------------------------------------------------- kernel
def _fused_actor_critic_kernel(
    x_ref, w1_ref, b1_ref, w2_ref, b2_ref, w3t_ref, b3t_ref, out_ref, *, action_dim
):
    """One batch tile of the fused actor+critic MLP.

    x_ref  : (TB, S)        f32 state tile (cast to bf16 in-kernel)
    w1_ref : (S, 2H)        bf16  [aw1 | cw1]
    w2_ref : (2H, 2H)       bf16  blockdiag(aw2, cw2)
    w3t_ref: (OUT8, 2H)     bf16  rows [0,A) = aw3ᵀ (actor half), row A = cw3ᵀ (critic half)
    b1/b2  : (1, 2H)        f32 fused biases
    b3t    : (OUT8, 1)      f32 fused layer-3 bias (column vector)
    out_ref: (OUT8, TB)     f32  rows [0,A) = probs, row A = value, rest = 0
    """
    x = x_ref[...].astype(jnp.bfloat16)   # bf16 only at the MXU; f32 stays in HBM

    # Layer 1 (fused actor||critic) -> (TB, 2H); f32 accumulate, f32 elementwise.
    h = jnp.dot(x, w1_ref[...], preferred_element_type=jnp.float32) + b1_ref[...]
    h = jnp.maximum(h, 0.0)

    # Layer 2 (block-diagonal) -> (TB, 2H).
    h = jnp.dot(h.astype(jnp.bfloat16), w2_ref[...],
                preferred_element_type=jnp.float32) + b2_ref[...]
    h = jnp.maximum(h, 0.0)

    # Layer 3, computed transposed (A·Bᵀ, flash-attention-style contraction on the
    # last dim of both operands): (OUT8, 2H) · (TB, 2H)ᵀ -> (OUT8, TB).
    z = lax.dot_general(
        w3t_ref[...], h.astype(jnp.bfloat16),
        dimension_numbers=(((1,), (1,)), ((), ())),
        preferred_element_type=jnp.float32,
    ) + b3t_ref[...]                                     # lane-broadcast bias

    # Numerically stable softmax over the actor rows (sublane axis).
    row = lax.broadcasted_iota(jnp.int32, z.shape, 0)
    is_logit = row < action_dim
    masked = jnp.where(is_logit, z, -jnp.inf)
    m = jnp.max(masked, axis=0, keepdims=True)           # (1, TB)
    e = jnp.exp(masked - m)                               # exactly 0 on non-logit rows
    denom = jnp.sum(e, axis=0, keepdims=True)             # (1, TB)
    probs = e * pl.reciprocal(denom, approx=True)         # EUP vrcp; renormalize in the
    #                                                      # wrapper if exact sum==1 needed

    # Packed output slab: probs in rows [0, A), raw critic value in row A, zeros after.
    out_ref[...] = jnp.where(is_logit, probs, z)


# --------------------------------------------------------------------------- wrapper
def _pick_batch_tile(B, block_b):
    """Single full tile for small B; otherwise >=2 lane-aligned (multiple-of-128)
    tiles so the parallel grid axis shards across both v7x TensorCores."""
    if B <= 128:
        return B
    half = pl.cdiv(B, 2)
    return min(block_b, pl.cdiv(half, 128) * 128)


def actor_critic_forward(state, fused, action_dim, *, block_b=4096):
    """state: (B, state_dim) f32.  fused: dict from fuse_params.  Returns (probs, value)."""
    B, S = state.shape
    H2 = fused["w1"].shape[1]
    OUT8 = fused["w3t"].shape[0]

    TB = _pick_batch_tile(B, block_b)
    grid = (pl.cdiv(B, TB),)          # ragged last tile; OOB rows masked on store

    kernel = functools.partial(_fused_actor_critic_kernel, action_dim=action_dim)

    # Advisory scheduling hint for XLA.
    flops = 2 * B * (S * H2 + H2 * H2 + H2 * OUT8)
    bytes_accessed = (
        B * S * 4
        + sum(int(v.size) * v.dtype.itemsize for v in fused.values())
        + B * OUT8 * 4
    )
    cost = pl.CostEstimate(flops=flops, transcendentals=B * OUT8,
                           bytes_accessed=bytes_accessed)

    def resident(shape):  # weights/biases: same block every grid step (stay in VMEM)
        return pl.BlockSpec(shape, lambda i: (0, 0))

    out = pl.pallas_call(
        kernel,
        out_shape=jax.ShapeDtypeStruct((OUT8, B), jnp.float32),
        grid=grid,
        in_specs=[
            pl.BlockSpec((TB, S), lambda i: (i, 0)),       # batch-tiled f32 state stream
            resident(fused["w1"].shape),
            resident(fused["b1"].shape),
            resident(fused["w2"].shape),
            resident(fused["b2"].shape),
            resident(fused["w3t"].shape),
            resident(fused["b3t"].shape),
        ],
        out_specs=pl.BlockSpec((OUT8, TB), lambda i: (0, i)),  # batch on lanes
        compiler_params=pltpu.CompilerParams(dimension_semantics=("parallel",)),
        cost_estimate=cost,
    )(state, fused["w1"], fused["b1"], fused["w2"], fused["b2"],
      fused["w3t"], fused["b3t"])

    probs = out[:action_dim, :].T                    # (B, action_dim)
    value = out[action_dim:action_dim + 1, :].T      # (B, 1)
    return probs, value


# --------------------------------------------------------------------------- params
def init_params(key, state_dim, action_dim, hidden_dim):
    """Deterministic init mirroring nn.Linear (weights stored transposed: (in, out))."""
    ks = jax.random.split(key, 12)

    def lin(kw, kb, fan_in, fan_out):
        bound = 1.0 / jnp.sqrt(fan_in)
        w = jax.random.uniform(kw, (fan_in, fan_out), jnp.float32, -bound, bound)
        b = jax.random.uniform(kb, (1, fan_out), jnp.float32, -bound, bound)
        return w, b

    p = {}
    p["aw1"], p["ab1"] = lin(ks[0], ks[1], state_dim, hidden_dim)
    p["aw2"], p["ab2"] = lin(ks[2], ks[3], hidden_dim, hidden_dim)
    p["aw3"], p["ab3"] = lin(ks[4], ks[5], hidden_dim, action_dim)
    p["cw1"], p["cb1"] = lin(ks[6], ks[7], state_dim, hidden_dim)
    p["cw2"], p["cb2"] = lin(ks[8], ks[9], hidden_dim, hidden_dim)
    p["cw3"], p["cb3"] = lin(ks[10], ks[11], hidden_dim, 1)
    return p


def fuse_params(p, action_dim):
    """Fuse actor/critic into block-diagonal bf16 weights; layer 3 stored transposed
    and sublane-padded so the kernel emits a tiny (OUT8, B) slab. Done ONCE."""
    S, H = p["aw1"].shape
    out8 = max(8, -(-(action_dim + 1) // 8) * 8)     # sublane-pad actor+critic rows

    w1 = jnp.concatenate([p["aw1"], p["cw1"]], axis=1).astype(jnp.bfloat16)   # (S, 2H)
    b1 = jnp.concatenate([p["ab1"], p["cb1"]], axis=1).astype(jnp.float32)    # (1, 2H)

    zH = jnp.zeros((H, H), jnp.float32)
    w2 = jnp.block([[p["aw2"], zH], [zH, p["cw2"]]]).astype(jnp.bfloat16)     # (2H, 2H)
    b2 = jnp.concatenate([p["ab2"], p["cb2"]], axis=1).astype(jnp.float32)    # (1, 2H)

    w3t = jnp.zeros((out8, 2 * H), jnp.float32)
    w3t = w3t.at[:action_dim, :H].set(p["aw3"].T)         # actor logits rows
    w3t = w3t.at[action_dim, H:].set(p["cw3"][:, 0])      # critic value row
    w3t = w3t.astype(jnp.bfloat16)                        # (OUT8, 2H)

    b3t = jnp.zeros((out8, 1), jnp.float32)
    b3t = b3t.at[:action_dim, 0].set(p["ab3"][0])
    b3t = b3t.at[action_dim, 0].set(p["cb3"][0, 0])       # (OUT8, 1)

    return dict(w1=w1, b1=b1, w2=w2, b2=b2, w3t=w3t, b3t=b3t)


# --------------------------------------------------------------------------- reference
def reference_forward(state, p):
    """Pure-JAX reference with the same bf16-at-the-matmul quantization."""
    bf = lambda a: a.astype(jnp.bfloat16).astype(jnp.float32)
    x = bf(state)
    h = jnp.maximum(x @ bf(p["aw1"]) + p["ab1"], 0.0)
    h = jnp.maximum(bf(h) @ bf(p["aw2"]) + p["ab2"], 0.0)
    logits = bf(h) @ bf(p["aw3"]) + p["ab3"]
    probs = jax.nn.softmax(logits, axis=-1)

    c = jnp.maximum(x @ bf(p["cw1"]) + p["cb1"], 0.0)
    c = jnp.maximum(bf(c) @ bf(p["cw2"]) + p["cb2"], 0.0)
    value = bf(c) @ bf(p["cw3"]) + p["cb3"]
    return probs, value


# --------------------------------------------------------------------------- main
if __name__ == "__main__":
    state_dim, action_dim, hidden_dim = 8, 4, 64

    key = jax.random.PRNGKey(0)
    k_params, k_state, k_state2 = jax.random.split(key, 3)
    params = init_params(k_params, state_dim, action_dim, hidden_dim)
    fused = fuse_params(params, action_dim)

    # ---- tiny batch: single full-array tile (grid of 1, lane-ragged store) ----
    batch = 2
    state = jax.random.normal(k_state, (batch, state_dim), dtype=jnp.float32)
    probs, value = actor_critic_forward(state, fused, action_dim)
    probs = jax.block_until_ready(probs)
    value = jax.block_until_ready(value)

    ref_probs, ref_value = reference_forward(state, params)
    assert probs.shape == (batch, action_dim)
    assert value.shape == (batch, 1)
    assert jnp.allclose(probs, ref_probs, atol=5e-3, rtol=5e-3)
    assert jnp.allclose(value, ref_value, atol=5e-3, rtol=5e-3)
    assert jnp.allclose(jnp.sum(probs, axis=-1), 1.0, atol=5e-3)

    # ---- larger batch: 2 lane-aligned 128-row tiles, ragged last tile, parallel grid ----
    big_b = 200
    state2 = jax.random.normal(k_state2, (big_b, state_dim), dtype=jnp.float32)
    probs2, value2 = actor_critic_forward(state2, fused, action_dim)
    probs2 = jax.block_until_ready(probs2)
    value2 = jax.block_until_ready(value2)

    ref_probs2, ref_value2 = reference_forward(state2, params)
    assert probs2.shape == (big_b, action_dim)
    assert value2.shape == (big_b, 1)
    assert jnp.allclose(probs2, ref_probs2, atol=5e-3, rtol=5e-3)
    assert jnp.allclose(value2, ref_value2, atol=5e-3, rtol=5e-3)
    assert jnp.allclose(jnp.sum(probs2, axis=-1), 1.0, atol=5e-3)

    print("KERNEL_OK")
</pallas_src>

<mosaic_0001>
module attributes {stable_mosaic.version = 11 : i64} {
  func.func @_fused_actor_critic_kernel(%arg0: i32, %arg1: memref<2x8xf32, #tpu.memory_space<vmem>>, %arg2: memref<8x128xbf16, #tpu.memory_space<vmem>>, %arg3: memref<1x128xf32, #tpu.memory_space<vmem>>, %arg4: memref<128x128xbf16, #tpu.memory_space<vmem>>, %arg5: memref<1x128xf32, #tpu.memory_space<vmem>>, %arg6: memref<8x128xbf16, #tpu.memory_space<vmem>>, %arg7: memref<8x1xf32, #tpu.memory_space<vmem>>, %arg8: memref<8x2xf32, #tpu.memory_space<vmem>>) attributes {dimension_semantics = [#tpu.dimension_semantics<parallel>], iteration_bounds = array<i64: 1>, scalar_prefetch = 0 : i64, scratch_operands = 0 : i64, tpu.core_type = #tpu.core_type<tc>, window_params = [{transform_indices = @transform_0, window_bounds = array<i64: 2, 8>}, {pipeline_mode = #tpu.pipeline_mode<synchronous>, transform_indices = @transform_1, window_bounds = array<i64: 8, 128>}, {pipeline_mode = #tpu.pipeline_mode<synchronous>, transform_indices = @transform_2, window_bounds = array<i64: 1, 128>}, {pipeline_mode = #tpu.pipeline_mode<synchronous>, transform_indices = @transform_3, window_bounds = array<i64: 128, 128>}, {pipeline_mode = #tpu.pipeline_mode<synchronous>, transform_indices = @transform_4, window_bounds = array<i64: 1, 128>}, {pipeline_mode = #tpu.pipeline_mode<synchronous>, transform_indices = @transform_5, window_bounds = array<i64: 8, 128>}, {pipeline_mode = #tpu.pipeline_mode<synchronous>, transform_indices = @transform_6, window_bounds = array<i64: 8, 1>}, {transform_indices = @transform_7, window_bounds = array<i64: 8, 2>}]} {
    %c0 = arith.constant 0 : index
    %c0_0 = arith.constant 0 : index
    %0 = vector.load %arg1[%c0, %c0_0] : memref<2x8xf32, #tpu.memory_space<vmem>>, vector<2x8xf32>
    %1 = arith.truncf %0 : vector<2x8xf32> to vector<2x8xbf16>
    %c0_1 = arith.constant 0 : index
    %c0_2 = arith.constant 0 : index
    %2 = vector.load %arg2[%c0_1, %c0_2] : memref<8x128xbf16, #tpu.memory_space<vmem>>, vector<8x128xbf16>
    %cst = arith.constant dense<0.000000e+00> : vector<2x128xf32>
    %3 = tpu.matmul %1, %2, %cst {dimension_numbers = #tpu.dot_dimension_numbers<[1], [0], [0], [1], [0, 0, 1, 1], [], []>} : vector<2x8xbf16>, vector<8x128xbf16>, vector<2x128xf32> -> vector<2x128xf32>
    %c0_3 = arith.constant 0 : index
    %c0_4 = arith.constant 0 : index
    %4 = vector.load %arg3[%c0_3, %c0_4] : memref<1x128xf32, #tpu.memory_space<vmem>>, vector<1x128xf32>
    %5 = vector.broadcast %4 : vector<1x128xf32> to vector<2x128xf32>
    %6 = arith.addf %3, %5 : vector<2x128xf32>
    %cst_5 = arith.constant 0.000000e+00 : f32
    %7 = vector.broadcast %cst_5 : f32 to vector<2x128xf32>
    %8 = arith.maximumf %6, %7 : vector<2x128xf32>
    %9 = arith.truncf %8 : vector<2x128xf32> to vector<2x128xbf16>
    %c0_6 = arith.constant 0 : index
    %c0_7 = arith.constant 0 : index
    %10 = vector.load %arg4[%c0_6, %c0_7] : memref<128x128xbf16, #tpu.memory_space<vmem>>, vector<128x128xbf16>
    %cst_8 = arith.constant dense<0.000000e+00> : vector<2x128xf32>
    %11 = tpu.matmul %9, %10, %cst_8 {dimension_numbers = #tpu.dot_dimension_numbers<[1], [0], [0], [1], [0, 0, 1, 1], [], []>} : vector<2x128xbf16>, vector<128x128xbf16>, vector<2x128xf32> -> vector<2x128xf32>
    %c0_9 = arith.constant 0 : index
    %c0_10 = arith.constant 0 : index
    %12 = vector.load %arg5[%c0_9, %c0_10] : memref<1x128xf32, #tpu.memory_space<vmem>>, vector<1x128xf32>
    %13 = vector.broadcast %12 : vector<1x128xf32> to vector<2x128xf32>
    %14 = arith.addf %11, %13 : vector<2x128xf32>
    %cst_11 = arith.constant 0.000000e+00 : f32
    %15 = vector.broadcast %cst_11 : f32 to vector<2x128xf32>
    %16 = arith.maximumf %14, %15 : vector<2x128xf32>
    %c0_12 = arith.constant 0 : index
    %c0_13 = arith.constant 0 : index
    %17 = vector.load %arg6[%c0_12, %c0_13] : memref<8x128xbf16, #tpu.memory_space<vmem>>, vector<8x128xbf16>
    %18 = arith.truncf %16 : vector<2x128xf32> to vector<2x128xbf16>
    %cst_14 = arith.constant dense<0.000000e+00> : vector<8x2xf32>
    %19 = tpu.matmul %17, %18, %cst_14 {dimension_numbers = #tpu.dot_dimension_numbers<[1], [1], [0], [0], [0, 0, 1, 0], [], []>} : vector<8x128xbf16>, vector<2x128xbf16>, vector<8x2xf32> -> vector<8x2xf32>
    %c0_15 = arith.constant 0 : index
    %c0_16 = arith.constant 0 : index
    %20 = vector.load %arg7[%c0_15, %c0_16] : memref<8x1xf32, #tpu.memory_space<vmem>>, vector<8x1xf32>
    %21 = vector.broadcast %20 : vector<8x1xf32> to vector<8x2xf32>
    %22 = arith.addf %19, %21 : vector<8x2xf32>
    %23 = tpu.iota {dimensions = array<i32: 0>} : vector<8x2xi32>
    %c4_i32 = arith.constant 4 : i32
    %24 = vector.broadcast %c4_i32 : i32 to vector<8x2xi32>
    %25 = arith.cmpi slt, %23, %24 : vector<8x2xi32>
    %cst_17 = arith.constant 0xFF800000 : f32
    %26 = vector.broadcast %cst_17 : f32 to vector<8x2xf32>
    %27 = arith.select %25, %22, %26 : vector<8x2xi1>, vector<8x2xf32>
    %cst_18 = arith.constant dense<0xFF800000> : vector<2xf32>
    %28 = vector.multi_reduction <maximumf>, %27, %cst_18 [0] : vector<8x2xf32> to vector<2xf32>
    %29 = vector.shape_cast %28 : vector<2xf32> to vector<1x2xf32>
    %30 = vector.broadcast %29 : vector<1x2xf32> to vector<8x2xf32>
    %31 = arith.subf %27, %30 : vector<8x2xf32>
    %32 = math.exp %31 : vector<8x2xf32>
    %cst_19 = arith.constant dense<0.000000e+00> : vector<2xf32>
    %33 = vector.multi_reduction <add>, %32, %cst_19 [0] : vector<8x2xf32> to vector<2xf32>
    %34 = vector.shape_cast %33 : vector<2xf32> to vector<1x2xf32>
    %35 = tpu.reciprocal %34 {approx = true} : vector<1x2xf32> -> vector<1x2xf32>
    %36 = vector.broadcast %35 : vector<1x2xf32> to vector<8x2xf32>
    %37 = arith.mulf %32, %36 : vector<8x2xf32>
    %38 = arith.select %25, %37, %22 : vector<8x2xi1>, vector<8x2xf32>
    %c0_20 = arith.constant 0 : index
    %c0_21 = arith.constant 0 : index
    %39 = vector.load %arg8[%c0_20, %c0_21] : memref<8x2xf32, #tpu.memory_space<vmem>>, vector<8x2xf32>
    tpu.vector_store %arg8[%c0_20, %c0_21], %38 {strides = array<i32>} : memref<8x2xf32, #tpu.memory_space<vmem>>, vector<8x2xf32>,
    return
  }
  func.func @transform_0(%arg0: i32) -> (i32, i32) {
    %c0_i32 = arith.constant 0 : i32
    %c0_i32_0 = arith.constant 0 : i32
    return %arg0, %c0_i32 : i32, i32
  }
  func.func @transform_1(%arg0: i32) -> (i32, i32) {
    %c0_i32 = arith.constant 0 : i32
    %c0_i32_0 = arith.constant 0 : i32
    %c0_i32_1 = arith.constant 0 : i32
    return %c0_i32, %c0_i32_0 : i32, i32
  }
  func.func @transform_2(%arg0: i32) -> (i32, i32) {
    %c0_i32 = arith.constant 0 : i32
    %c0_i32_0 = arith.constant 0 : i32
    %c0_i32_1 = arith.constant 0 : i32
    return %c0_i32, %c0_i32_0 : i32, i32
  }
  func.func @transform_3(%arg0: i32) -> (i32, i32) {
    %c0_i32 = arith.constant 0 : i32
    %c0_i32_0 = arith.constant 0 : i32
    %c0_i32_1 = arith.constant 0 : i32
    return %c0_i32, %c0_i32_0 : i32, i32
  }
  func.func @transform_4(%arg0: i32) -> (i32, i32) {
    %c0_i32 = arith.constant 0 : i32
    %c0_i32_0 = arith.constant 0 : i32
    %c0_i32_1 = arith.constant 0 : i32
    return %c0_i32, %c0_i32_0 : i32, i32
  }
  func.func @transform_5(%arg0: i32) -> (i32, i32) {
    %c0_i32 = arith.constant 0 : i32
    %c0_i32_0 = arith.constant 0 : i32
    %c0_i32_1 = arith.constant 0 : i32
    return %c0_i32, %c0_i32_0 : i32, i32
  }
  func.func @transform_6(%arg0: i32) -> (i32, i32) {
    %c0_i32 = arith.constant 0 : i32
    %c0_i32_0 = arith.constant 0 : i32
    %c0_i32_1 = arith.constant 0 : i32
    return %c0_i32, %c0_i32_0 : i32, i32
  }
  func.func @transform_7(%arg0: i32) -> (i32, i32) {
    %c0_i32 = arith.constant 0 : i32
    %c0_i32_0 = arith.constant 0 : i32
    return %c0_i32, %arg0 : i32, i32
  }
}

</mosaic_0001>

<llo_original>
// kernel: tpu_custom_call.1
$region0: #{tpu_custom_call.1}
  #allocation0 [shape = 'u32[]', space=smem, size = 0x4, offset = 0x4, fixed_abs, tag = 'smem constant byte address 0x4 - core index']
  #allocation1 [shape = 'u32[72,128]{1,0:T(1,128)}', space=vmem, size = 0x9000, scoped, tag = 'internal scratch']
  %s0 = inlined_call_operand.hbm [shape: f32[2,8], index: 0, kind: input, shape index: {}]
  %s1 = inlined_call_operand.vmem [shape: bf16[8,128], index: 1, kind: input, shape index: {}]
  %s2 = inlined_call_operand.vmem [shape: f32[1,128], index: 2, kind: input, shape index: {}]
  %s3 = inlined_call_operand.hbm [shape: bf16[128,128], index: 3, kind: input, shape index: {}]
  %s4 = inlined_call_operand.vmem [shape: f32[1,128], index: 4, kind: input, shape index: {}]
  %s5 = inlined_call_operand.vmem [shape: bf16[8,128], index: 5, kind: input, shape index: {}]
  %s6 = inlined_call_operand.vmem [shape: f32[8,1], index: 6, kind: input, shape index: {}]
  %s7 = inlined_call_operand.vmem [shape: f32[8,2], index: 7, kind: output, shape index: {}]
  %s8 = sld [smem:[#allocation0]]
  $region46: #{tpu_custom_call.1} parent=0
    _
  %s10 = ssub.s32 1, %s8
  %s11 = scalar_select 0, %s10, %s8
  $region1: #{tpu_custom_call.1} parent=0
    #allocation2 [shape = 'u8[1024]{0}', space=vmem, size = 0x400, scoped, tag = 'input window, operand 0, single buffered']
    #allocation3 [shape = 's32[1]{0}', space=sflag, size = 0x4, scoped, tag = 'scoped memory for tpu_custom_call.1']
    #allocation4 [shape = 'u8[32768]{0}', space=vmem, size = 0x8000, scoped, tag = 'input window, operand 3, single buffered']
    #allocation5 [shape = 's32[1]{0}', space=sflag, size = 0x4, scoped, tag = 'scoped memory for tpu_custom_call.1']
    %12 = vsyncpa [#allocation3], 0
    %13 = vsyncpa [#allocation5], 0
    // Predicated region
    $region2: #{tpu_custom_call.1} parent=1 // pred_check
      _
    $region3: #{tpu_custom_call.1} parent=1 // pred_check_branch
      %15 = sbr.rel (0) target = $region5
    $region4: #{tpu_custom_call.1} parent=1 // pred_region
      %17 = vsyncadd [#allocation3], 0
      %s19 = sshll.u32 %s0, 4
      %s20 = int_to_ptr.hbm [resolvable:$true] %s19
      %s21 = sshll.u32 [#allocation2], 4
      %s22 = int_to_ptr.vmem [resolvable:$true] %s21
      %24 = dma.hbm_to_vmem [thread:$0]  %s20, 32, %s22, [#allocation3]
    $region5: #{tpu_custom_call.1} parent=1 // pred_fallthru
      _
    // Predicated region
    $region6: #{tpu_custom_call.1} parent=1 // pred_check
      _
    $region7: #{tpu_custom_call.1} parent=1 // pred_check_branch
      %26 = sbr.rel (0) target = $region9
    $region8: #{tpu_custom_call.1} parent=1 // pred_region
      _
    $region9: #{tpu_custom_call.1} parent=1 // pred_fallthru
      _
    // Predicated region
    $region10: #{tpu_custom_call.1} parent=1 // pred_check
      _
    $region11: #{tpu_custom_call.1} parent=1 // pred_check_branch
      %28 = sbr.rel (0) target = $region13
    $region12: #{tpu_custom_call.1} parent=1 // pred_region
      _
    $region13: #{tpu_custom_call.1} parent=1 // pred_fallthru
      _
    // Predicated region
    $region14: #{tpu_custom_call.1} parent=1 // pred_check
      _
    $region15: #{tpu_custom_call.1} parent=1 // pred_check_branch
      %30 = sbr.rel (0) target = $region17
    $region16: #{tpu_custom_call.1} parent=1 // pred_region
      %32 = vsyncadd [#allocation5], 0
      %s33 = sshll.u32 %s3, 4
      %s34 = int_to_ptr.hbm [resolvable:$true] %s33
      %s35 = sshll.u32 [#allocation4], 4
      %s36 = int_to_ptr.vmem [resolvable:$true] %s35
      %41 = dma.hbm_to_vmem [thread:$0]  %s34, 1024, %s36, [#allocation5], 64, 64, 4
    $region17: #{tpu_custom_call.1} parent=1 // pred_fallthru
      _
    // Predicated region
    $region18: #{tpu_custom_call.1} parent=1 // pred_check
      _
    $region19: #{tpu_custom_call.1} parent=1 // pred_check_branch
      %43 = sbr.rel (0) target = $region21
    $region20: #{tpu_custom_call.1} parent=1 // pred_region
      _
    $region21: #{tpu_custom_call.1} parent=1 // pred_fallthru
      _
    // Predicated region
    $region22: #{tpu_custom_call.1} parent=1 // pred_check
      _
    $region23: #{tpu_custom_call.1} parent=1 // pred_check_branch
      %45 = sbr.rel (0) target = $region25
    $region24: #{tpu_custom_call.1} parent=1 // pred_region
      _
    $region25: #{tpu_custom_call.1} parent=1 // pred_fallthru
      _
    // Predicated region
    $region26: #{tpu_custom_call.1} parent=1 // pred_check
      _
    $region27: #{tpu_custom_call.1} parent=1 // pred_check_branch
      %47 = sbr.rel (0) target = $region29
    $region28: #{tpu_custom_call.1} parent=1 // pred_region
      _
    $region29: #{tpu_custom_call.1} parent=1 // pred_fallthru
      _
    // Predicated region
    $region30: #{tpu_custom_call.1} parent=1 // pred_check
      _
    $region31: #{tpu_custom_call.1} parent=1 // pred_check_branch
      %49 = sbr.rel (0) target = $region33
    $region32: #{tpu_custom_call.1} parent=1 // pred_region
      %51 = dma.done [#allocation3], 32
    $region33: #{tpu_custom_call.1} parent=1 // pred_fallthru
      _
    // Predicated region
    $region34: #{tpu_custom_call.1} parent=1 // pred_check
      _
    $region35: #{tpu_custom_call.1} parent=1 // pred_check_branch
      %53 = sbr.rel (0) target = $region37
    $region36: #{tpu_custom_call.1} parent=1 // pred_region
      %55 = dma.done [#allocation5], 1024
    $region37: #{tpu_custom_call.1} parent=1 // pred_fallthru
      _
    %v57 = vld [vmem:[#allocation2] sm:$0x3]
    %v58 = vpack.c.bf16 %v57, %v57
    %v59 = vld [vmem:[%s1] sm:$0xf]
    %v60 = vld [vmem:[%s2] sm:$0x1]
    %v62 = vperm.slane %v60, 0
    %vm64 = vcmask 64512
    %v66 = vsel %vm64, %v58, 0
    %vm68 = vcmask 1043456
    %v70 = vsel %vm68, %v59, 0
    %72 = vmatpush.bf16.msra.mxu0 0
    %73 = vmatpush.bf16.msra.mxu0 0
    %74 = vmatpush.bf16.msra.mxu0 0
    %75 = vmatpush.bf16.msra.mxu0 0
    %76 = vmatpush.bf16.msra.mxu0 0
    %77 = vmatpush.bf16.msra.mxu0 0
    %78 = vmatpush.bf16.msra.mxu0 0
    %79 = vmatpush.bf16.msra.mxu0 %v70
    %80 = vmatmul.bf16.gmra.mxu0 %v66
    %v81 = vpop.f32.mrf.mxu0
    %v82 = vadd.f32 %v62, %v81
    %v83 = vpop.f32.mrf.mxu0
    %84 = vdwg.mxu0
    %v85 = vmax.f32 %v82, 0.0
    %v86 = vpack.c.bf16 %v85, %v85
    %v87 = vld [vmem:[#allocation4] sm:$0xf]
    %v88 = vld [vmem:[#allocation4 + $0x4] sm:$0xf]
    %v89 = vld [vmem:[#allocation4 + $0x8] sm:$0xf]
    %v90 = vld [vmem:[#allocation4 + $0xc] sm:$0xf]
    %v91 = vld [vmem:[#allocation4 + $0x10] sm:$0xf]
    %v92 = vld [vmem:[#allocation4 + $0x14] sm:$0xf]
    %v93 = vld [vmem:[#allocation4 + $0x18] sm:$0xf]
    %v94 = vld [vmem:[#allocation4 + $0x1c] sm:$0xf]
    %v95 = vld [vmem:[#allocation4 + $0x20] sm:$0xf]
    %v96 = vld [vmem:[#allocation4 + $0x24] sm:$0xf]
    %v97 = vld [vmem:[#allocation4 + $0x28] sm:$0xf]
    %v98 = vld [vmem:[#allocation4 + $0x2c] sm:$0xf]
    %v99 = vld [vmem:[#allocation4 + $0x30] sm:$0xf]
    %v100 = vld [vmem:[#allocation4 + $0x34] sm:$0xf]
    %v101 = vld [vmem:[#allocation4 + $0x38] sm:$0xf]
    %v102 = vld [vmem:[#allocation4 + $0x3c] sm:$0xf]
    %v103 = vld [vmem:[%s4] sm:$0x1]
    %v105 = vperm.slane %v103, 0
    %v123 = vunpack.c.l.b16 %v87
    %v124 = vunpack.c.l.b16 %v88
    %v125 = vunpack.c.l.b16 %v89
    %v126 = vunpack.c.l.b16 %v90
    %v127 = vunpack.c.l.b16 %v91
    %v128 = vunpack.c.l.b16 %v92
    %v129 = vunpack.c.l.b16 %v93
    %v130 = vunpack.c.l.b16 %v94
    %v131 = vunpack.c.l.b16 %v95
    %v132 = vunpack.c.l.b16 %v96
    %v133 = vunpack.c.l.b16 %v97
    %v134 = vunpack.c.l.b16 %v98
    %v135 = vunpack.c.l.b16 %v99
    %v136 = vunpack.c.l.b16 %v100
    %v137 = vunpack.c.l.b16 %v101
    %v138 = vunpack.c.l.b16 %v102
    %v139 = vpack.c.b16 %v124, %v123
    %v140 = vpack.c.b16 %v126, %v125
    %v141 = vpack.c.b16 %v128, %v127
    %v142 = vpack.c.b16 %v130, %v129
    %v143 = vpack.c.b16 %v132, %v131
    %v144 = vpack.c.b16 %v134, %v133
    %v145 = vpack.c.b16 %v136, %v135
    %v146 = vpack.c.b16 %v138, %v137
    %155 = vmatpush.bf16.msra.mxu0 %v146
    %156 = vmatpush.bf16.msra.mxu0 %v145
    %157 = vmatpush.bf16.msra.mxu0 %v144
    %158 = vmatpush.bf16.msra.mxu0 %v143
    %159 = vmatpush.bf16.msra.mxu0 %v142
    %160 = vmatpush.bf16.msra.mxu0 %v141
    %161 = vmatpush.bf16.msra.mxu0 %v140
    %162 = vmatpush.bf16.msra.mxu0 %v139
    %163 = vmatmul.bf16.gmra.mxu0 %v86
    %v164 = vpop.f32.mrf.mxu0
    %v165 = vadd.f32 %v105, %v164
    %v166 = vpop.f32.mrf.mxu0
    %167 = vdwg.mxu0
    %v168 = vmax.f32 %v165, 0.0
    %v169 = vld [vmem:[%s5] sm:$0xf]
    %v170 = vpack.c.bf16 %v168, %v168
    %v171 = vld [vmem:[%s6] sm:$0xff]
    %173 = vset.pattern.permute.xlu0 0
    %174 = vperm.xlu0 %173, %v171
    %v175 = vpop.permute.xlu0 %174
    %177 = vmatpush.bf16.xpose.msra.mxu0 0
    %178 = vmatpush.bf16.xpose.msra.mxu0 0
    %179 = vmatpush.bf16.xpose.msra.mxu0 0
    %180 = vmatpush.bf16.xpose.msra.mxu0 0
    %181 = vmatpush.bf16.xpose.msra.mxu0 0
    %182 = vmatpush.bf16.xpose.msra.mxu0 0
    %183 = vmatpush.bf16.xpose.msra.mxu0 0
    %184 = vmatpush.bf16.xpose.msra.mxu0 %v170
    %185 = vmatmul.bf16.gmra.mxu0 %v169
    %v186 = vpop.f32.mrf.mxu0
    %v187 = vadd.f32 %v175, %v186
    %v188 = vpop.f32.mrf.mxu0
    %189 = vdwg.mxu0
    %v190 = vlaneseq
    %v191 = vshrl.u32 %v190, 7
    %vm192 = vcmp.lt.s32.totalorder %v191, 4
    %v193 = vsel %vm192, %v187, -inf
    %vm194 = vcmask 15360
    %v195 = vsel %vm194, %v193, -inf
    %v196 = vrot.slane %v195, 4
    %v197 = vmax.f32 %v195, %v196
    %v198 = vrot.slane %v197, 2
    %v199 = vmax.f32 %v197, %v198
    %v200 = vrot.slane %v199, 1
    %v201 = vmax.f32 %v199, %v200
    %v202 = vsub.f32 %v193, %v201
    %v203 = vmul.f32 %v202, 1.442695
    %v204 = vpow.pop %v203
    %v205 = vsel %vm194, %v204, 0.0
    %v206 = vrot.slane %v205, 4
    %v207 = vadd.f32 %v205, %v206
    %v208 = vrot.slane %v207, 2
    %v209 = vadd.f32 %v207, %v208
    %v210 = vrot.slane %v209, 1
    %v211 = vadd.f32 %v209, %v210
    %v212 = vrcp.pop %v211
    %v213 = vmul.f32 %v204, %v212
    %v214 = vsel %vm192, %v213, %v187
    %215 = vst.msk [vmem:[%s7] sm:$0xff] %vm194, %v214
    // Predicated region
    $region38: #{tpu_custom_call.1} parent=1 // pred_check
      _
    $region39: #{tpu_custom_call.1} parent=1 // pred_check_branch
      %217 = sbr.rel (0) target = $region41
    $region40: #{tpu_custom_call.1} parent=1 // pred_region
      _
    $region41: #{tpu_custom_call.1} parent=1 // pred_fallthru
      _
    // Predicated region
    $region42: #{tpu_custom_call.1} parent=1 // pred_check
      _
    $region43: #{tpu_custom_call.1} parent=1 // pred_check_branch
      %219 = sbr.rel (0) target = $region45
    $region44: #{tpu_custom_call.1} parent=1 // pred_region
      _
    $region45: #{tpu_custom_call.1} parent=1 // pred_fallthru
      _
    %220 = vsyncpa [#allocation3], 1
    %221 = vsyncpa [#allocation5], 1

</llo_original>
